<compile_context>
chip_gen: v5e
topology: v5e:2x2
jax: 0.10.0
libtpu: 0.0.40
codegen_flags: <defaults>
</compile_context>

<pallas_src>
import functools

import jax
import jax.numpy as jnp
from jax.experimental import pallas as pl
from jax.experimental.pallas import tpu as pltpu


BN_EPS = 1e-5
_TILE_VMEM_BUDGET = 32 * 1024 * 1024      # tile-sizing budget (safe on all gens)
_FALLBACK_VMEM_LIMIT = 48 * 1024 * 1024   # <= v7x physical 64 MiB


# ---------------------------------------------------------------------------
# Whole-network fused kernel (also reused for single-tile per-layer calls).
# ---------------------------------------------------------------------------

def _make_fused_kernel(n_layers, bn, relu_flags, eps):
    """Kernel running n_layers of Linear(+BN)(+ReLU) entirely in VMEM."""
    per = 4 if bn else 2

    def kernel(*refs):
        x_ref = refs[0]
        o_ref = refs[-1]
        p_refs = refs[1:-1]
        h = x_ref[...]                                   # bf16 activations
        for l in range(n_layers):
            w_ref, b_ref = p_refs[per * l], p_refs[per * l + 1]
            y = jnp.dot(h, w_ref[...],
                        preferred_element_type=jnp.float32) + b_ref[...]
            if bn:
                g_ref, bt_ref = p_refs[per * l + 2], p_refs[per * l + 3]
                # Training-mode BatchNorm1d: biased batch variance, centered
                # (stable) formulation since the whole batch is resident.
                mean = jnp.mean(y, axis=0, keepdims=True)
                var = jnp.mean(jnp.square(y - mean), axis=0, keepdims=True)
                y = (y - mean) * jax.lax.rsqrt(var + eps) * g_ref[...] \
                    + bt_ref[...]
            if relu_flags[l]:
                y = jnp.maximum(y, 0.0)
            # Next matmul consumes bf16 operands; final layer stays f32.
            h = y.astype(jnp.bfloat16) if l < n_layers - 1 else y
        o_ref[...] = h.astype(o_ref.dtype)

    return kernel


def _fused_forward(x_bf16, ws, bs, gs, bts, *, bn, relu_flags, eps, out_dtype):
    """One pallas_call for the whole (sub)network; everything lives in VMEM."""
    n_layers = len(ws)
    inputs = [x_bf16]
    for l in range(n_layers):
        inputs += [ws[l], bs[l]]
        if bn:
            inputs += [gs[l], bts[l]]
    M = x_bf16.shape[0]
    n_out = ws[-1].shape[1]
    kernel = _make_fused_kernel(n_layers, bn, tuple(relu_flags), eps)
    # No grid / no BlockSpecs: every operand is a whole-array VMEM block.
    return pl.pallas_call(
        kernel,
        out_shape=jax.ShapeDtypeStruct((M, n_out), out_dtype),
    )(*inputs)


def _fused_fits(M, sizes, bn, budget_bytes):
    if budget_bytes <= 0:
        return False
    total = M * sizes[0] * 2                         # bf16 input
    peak_act = 0
    for l in range(len(sizes) - 1):
        K, N = sizes[l], sizes[l + 1]
        total += K * N * 2 + N * 4 + (2 * N * 4 if bn else 0)
        peak_act = max(peak_act, 2 * M * N * 4)      # f32 y + headroom
    total += M * sizes[-1] * 4                       # f32 output
    return (total + peak_act) <= budget_bytes


# ---------------------------------------------------------------------------
# Per-layer fallback kernels (large models that do not fit VMEM as a whole).
# ---------------------------------------------------------------------------

def _linear_bn_relu_kernel(x_ref, w_ref, b_ref, g_ref, beta_ref, o_ref,
                           sum_ref, sq_ref, scale_ref, shift_ref,
                           *, relu, eps, m_total):
    """Two-phase fused Linear + BatchNorm1d(batch stats) + optional ReLU.

    grid = (2, num_m_tiles), both axes "arbitrary" (sequential):
      phase 0: y = x @ W + b per tile, accumulate sum / sum-of-squares into
               persistent VMEM scratch; nothing is written to HBM (the output
               index_map aliases block 0 for the whole phase).
      phase 1: tile 0 finalizes mean/var -> scale/shift; every tile recomputes
               y and stores the normalized (+ReLU) result.
    """
    phase = pl.program_id(0)
    tile = pl.program_id(1)

    # bf16 operands on the MXU, f32 accumulation.
    y = jnp.dot(x_ref[...], w_ref[...],
                preferred_element_type=jnp.float32) + b_ref[...]

    @pl.when((phase == 0) & (tile == 0))
    def _():
        sum_ref[...] = jnp.zeros_like(sum_ref)
        sq_ref[...] = jnp.zeros_like(sq_ref)

    @pl.when(phase == 0)
    def _():
        sum_ref[...] += jnp.sum(y, axis=0, keepdims=True)
        sq_ref[...] += jnp.sum(y * y, axis=0, keepdims=True)

    @pl.when((phase == 1) & (tile == 0))
    def _():
        inv_m = 1.0 / m_total
        mean = sum_ref[...] * inv_m
        # E[y^2] - mean^2 can go slightly negative in f32 -> clamp.
        var = jnp.maximum(sq_ref[...] * inv_m - mean * mean, 0.0)
        scale = g_ref[...] * jax.lax.rsqrt(var + eps)
        scale_ref[...] = scale
        shift_ref[...] = beta_ref[...] - mean * scale

    @pl.when(phase == 1)
    def _():
        z = y * scale_ref[...] + shift_ref[...]
        if relu:
            z = jnp.maximum(z, 0.0)
        o_ref[...] = z.astype(o_ref.dtype)


def _linear_act_kernel(x_ref, w_ref, b_ref, o_ref, *, relu):
    """Fused Linear (+ optional ReLU) for the batch_norm=False path."""
    y = jnp.dot(x_ref[...], w_ref[...],
                preferred_element_type=jnp.float32) + b_ref[...]
    if relu:
        y = jnp.maximum(y, 0.0)
    o_ref[...] = y.astype(o_ref.dtype)


def _choose_tile_m(M, K, N, max_tile_m=None, budget_bytes=_TILE_VMEM_BUDGET):
    """Largest multiple-of-16 divisor of M that fits the VMEM budget."""
    # fixed: double-buffered bf16 (K,N) weight + bias/gamma/beta + f32 scratch
    fixed = 2 * K * N * 2 + 6 * N * 4 + 4 * N * 4
    per_row = 2 * (K * 2 + N * 4)       # double-buffered bf16 x-tile + f32 out
    tm = (budget_bytes - fixed) // per_row if budget_bytes > fixed else 0
    tm = int(min(tm, M))
    if max_tile_m is not None:
        tm = min(tm, int(max_tile_m))
    tm = (tm // 16) * 16                # bf16-friendly sublane multiple
    while tm >= 16 and M % tm:
        tm -= 16
    if tm < 16 or M % tm:
        # TODO(synk): pad + mask ragged M instead of a whole-batch block.
        tm = M
    return tm


def _linear_layer(x, w, b2, *, bn, relu, gamma2, beta2, eps, out_dtype,
                  max_tile_m=None):
    """One MLP layer (Linear -> BN -> ReLU), batch dimension tiled on a grid."""
    M, K = x.shape
    K2, N = w.shape
    assert K == K2, (K, K2)

    tm = _choose_tile_m(M, K, N, max_tile_m=max_tile_m)
    nm = M // tm

    if bn and nm == 1:
        # Whole batch fits one tile -> single-phase inline (centered) BN.
        return _fused_forward(x, [w], [b2], [gamma2], [beta2], bn=True,
                              relu_flags=[relu], eps=eps, out_dtype=out_dtype)

    if bn:
        kern = functools.partial(_linear_bn_relu_kernel, relu=relu, eps=eps,
                                 m_total=float(M))
        return pl.pallas_call(
            kern,
            out_shape=jax.ShapeDtypeStruct((M, N), out_dtype),
            grid=(2, nm),
            in_specs=[
                pl.BlockSpec((tm, K), lambda p, i: (i, 0)),   # activation tile
                pl.BlockSpec((K, N), lambda p, i: (0, 0)),    # bf16 W (fetched once)
                pl.BlockSpec((1, N), lambda p, i: (0, 0)),    # bias
                pl.BlockSpec((1, N), lambda p, i: (0, 0)),    # gamma
                pl.BlockSpec((1, N), lambda p, i: (0, 0)),    # beta
            ],
            # Phase 0 never stores; all its steps alias block 0, which phase 1
            # tile 0 overwrites => exactly one HBM writeback per output block.
            out_specs=pl.BlockSpec((tm, N), lambda p, i: (i * p, 0)),
            scratch_shapes=[
                pltpu.VMEM((1, N), jnp.float32),   # sum
                pltpu.VMEM((1, N), jnp.float32),   # sum of squares
                pltpu.VMEM((1, N), jnp.float32),   # scale
                pltpu.VMEM((1, N), jnp.float32),   # shift
            ],
            compiler_params=pltpu.CompilerParams(
                dimension_semantics=("arbitrary", "arbitrary"),
                vmem_limit_bytes=_FALLBACK_VMEM_LIMIT),
        )(x, w, b2, gamma2, beta2)

    kern = functools.partial(_linear_act_kernel, relu=relu)
    return pl.pallas_call(
        kern,
        out_shape=jax.ShapeDtypeStruct((M, N), out_dtype),
        grid=(nm,),
        in_specs=[
            pl.BlockSpec((tm, K), lambda i: (i, 0)),
            pl.BlockSpec((K, N), lambda i: (0, 0)),
            pl.BlockSpec((1, N), lambda i: (0, 0)),
        ],
        out_specs=pl.BlockSpec((tm, N), lambda i: (i, 0)),
        compiler_params=pltpu.CompilerParams(
            dimension_semantics=("parallel",),
            vmem_limit_bytes=_FALLBACK_VMEM_LIMIT),
    )(x, w, b2)


# ---------------------------------------------------------------------------
# Forward pass + plain-JAX reference
# ---------------------------------------------------------------------------

def mlp_forward(x, params, *, batch_norm=True, eps=BN_EPS,
                fuse_vmem_budget=8 * 1024 * 1024, max_tile_m=None):
    """MLP(sizes).forward(x): [Linear, BN, ReLU]*(L-1) + [Linear, BN]."""
    n_layers = len(params["w"])
    M = x.shape[0]
    sizes = [x.shape[1]] + [w.shape[1] for w in params["w"]]

    # bf16 at the HBM boundary: matmul operands only; BN params / math in f32.
    ws = [w.astype(jnp.bfloat16) for w in params["w"]]
    bs = [b.reshape(1, -1).astype(jnp.float32) for b in params["b"]]
    gs = [g.reshape(1, -1).astype(jnp.float32) for g in params["gamma"]]
    bts = [bt.reshape(1, -1).astype(jnp.float32) for bt in params["beta"]]
    h = x.astype(jnp.bfloat16)
    relu_flags = [l < n_layers - 1 for l in range(n_layers)]

    if _fused_fits(M, sizes, batch_norm, fuse_vmem_budget):
        # Whole-MLP fusion: one pallas_call, no intermediate HBM traffic.
        return _fused_forward(h, ws, bs, gs, bts, bn=batch_norm,
                              relu_flags=relu_flags, eps=eps,
                              out_dtype=jnp.float32)

    # Large-model fallback: one fused pallas_call per layer, M tiled; the
    # intermediate activations that hit HBM are stored in bf16.
    for l in range(n_layers):
        last = l == n_layers - 1
        h = _linear_layer(
            h, ws[l], bs[l], bn=batch_norm, relu=not last,
            gamma2=gs[l], beta2=bts[l], eps=eps,
            out_dtype=jnp.float32 if last else jnp.bfloat16,
            max_tile_m=max_tile_m)
    return h


def mlp_reference(x, params, *, batch_norm=True, eps=BN_EPS):
    """Plain-JAX reference with the same mixed-precision recipe."""
    n_layers = len(params["w"])
    h = x.astype(jnp.bfloat16)
    for l in range(n_layers):
        last = l == n_layers - 1
        y = jnp.dot(h, params["w"][l].astype(jnp.bfloat16),
                    preferred_element_type=jnp.float32) + params["b"][l]
        if batch_norm:
            mean = jnp.mean(y, axis=0, keepdims=True)
            var = jnp.mean(jnp.square(y - mean), axis=0, keepdims=True)
            y = (y - mean) * jax.lax.rsqrt(var + eps) * params["gamma"][l] \
                + params["beta"][l]
        if not last:
            y = jnp.maximum(y, 0.0).astype(jnp.bfloat16)
        h = y
    return h


# ---------------------------------------------------------------------------
# main
# ---------------------------------------------------------------------------

if __name__ == "__main__":
    # MLP([in, hidden, out]) as used inside AttentionPert (e.g. MLP([E, H])).
    sizes = [64, 128, 128]
    M = 256

    key = jax.random.PRNGKey(0)
    n_layers = len(sizes) - 1
    keys = jax.random.split(key, 1 + 2 * n_layers)
    kx, kw = keys[0], keys[1:]

    params = {"w": [], "b": [], "gamma": [], "beta": []}
    for l in range(n_layers):
        bound = 1.0 / (sizes[l] ** 0.5)              # ~ torch.nn.Linear init
        params["w"].append(jax.random.uniform(
            kw[2 * l], (sizes[l], sizes[l + 1]), jnp.float32, -bound, bound))
        params["b"].append(jax.random.uniform(
            kw[2 * l + 1], (sizes[l + 1],), jnp.float32, -bound, bound))
        params["gamma"].append(jnp.ones((sizes[l + 1],), jnp.float32))
        params["beta"].append(jnp.zeros((sizes[l + 1],), jnp.float32))

    x = jax.random.normal(kx, (M, sizes[0]), jnp.float32)

    ref_bn = mlp_reference(x, params, batch_norm=True)
    ref_nobn = mlp_reference(x, params, batch_norm=False)

    # (A) whole-MLP fused path (default at these sizes: single pallas_call).
    out_a = jax.block_until_ready(mlp_forward(x, params, batch_norm=True))
    assert out_a.shape == (M, sizes[-1]), out_a.shape
    assert bool(jnp.all(jnp.isfinite(out_a)))
    assert bool(jnp.allclose(out_a, ref_bn, rtol=2e-2, atol=2e-2)), \
        float(jnp.max(jnp.abs(out_a - ref_bn)))

    # (B) forced per-layer tiled path (exercises the two-phase BN kernel).
    out_b = jax.block_until_ready(mlp_forward(
        x, params, batch_norm=True, fuse_vmem_budget=0, max_tile_m=128))
    assert bool(jnp.allclose(out_b, ref_bn, rtol=2e-2, atol=2e-2)), \
        float(jnp.max(jnp.abs(out_b - ref_bn)))

    # (C) batch_norm=False path (forced per-layer Linear(+ReLU) kernel).
    out_c = jax.block_until_ready(mlp_forward(
        x, params, batch_norm=False, fuse_vmem_budget=0, max_tile_m=128))
    assert bool(jnp.allclose(out_c, ref_nobn, rtol=2e-2, atol=2e-2)), \
        float(jnp.max(jnp.abs(out_c - ref_nobn)))

    print("KERNEL_OK")
</pallas_src>

<mosaic_0001>
module attributes {stable_mosaic.version = 11 : i64} {
  func.func @kernel(%arg0: memref<256x64xbf16, #tpu.memory_space<vmem>>, %arg1: memref<64x128xbf16, #tpu.memory_space<vmem>>, %arg2: memref<1x128xf32, #tpu.memory_space<vmem>>, %arg3: memref<1x128xf32, #tpu.memory_space<vmem>>, %arg4: memref<1x128xf32, #tpu.memory_space<vmem>>, %arg5: memref<128x128xbf16, #tpu.memory_space<vmem>>, %arg6: memref<1x128xf32, #tpu.memory_space<vmem>>, %arg7: memref<1x128xf32, #tpu.memory_space<vmem>>, %arg8: memref<1x128xf32, #tpu.memory_space<vmem>>, %arg9: memref<256x128xf32, #tpu.memory_space<vmem>>) attributes {dimension_semantics = [], scalar_prefetch = 0 : i64, scratch_operands = 0 : i64, tpu.core_type = #tpu.core_type<tc>} {
    %c0 = arith.constant 0 : index
    %c0_0 = arith.constant 0 : index
    %0 = vector.load %arg0[%c0, %c0_0] : memref<256x64xbf16, #tpu.memory_space<vmem>>, vector<256x64xbf16>
    %c0_1 = arith.constant 0 : index
    %c0_2 = arith.constant 0 : index
    %1 = vector.load %arg1[%c0_1, %c0_2] : memref<64x128xbf16, #tpu.memory_space<vmem>>, vector<64x128xbf16>
    %cst = arith.constant dense<0.000000e+00> : vector<256x128xf32>
    %2 = tpu.matmul %0, %1, %cst {dimension_numbers = #tpu.dot_dimension_numbers<[1], [0], [0], [1], [0, 0, 1, 1], [], []>} : vector<256x64xbf16>, vector<64x128xbf16>, vector<256x128xf32> -> vector<256x128xf32>
    %c0_3 = arith.constant 0 : index
    %c0_4 = arith.constant 0 : index
    %3 = vector.load %arg2[%c0_3, %c0_4] : memref<1x128xf32, #tpu.memory_space<vmem>>, vector<1x128xf32>
    %4 = vector.broadcast %3 : vector<1x128xf32> to vector<256x128xf32>
    %5 = arith.addf %2, %4 : vector<256x128xf32>
    %cst_5 = arith.constant dense<0.000000e+00> : vector<128xf32>
    %6 = vector.multi_reduction <add>, %5, %cst_5 [0] : vector<256x128xf32> to vector<128xf32>
    %7 = vector.shape_cast %6 : vector<128xf32> to vector<1x128xf32>
    %cst_6 = arith.constant 2.560000e+02 : f32
    %8 = vector.broadcast %cst_6 : f32 to vector<1x128xf32>
    %9 = arith.divf %7, %8 : vector<1x128xf32>
    %10 = vector.broadcast %9 : vector<1x128xf32> to vector<256x128xf32>
    %11 = arith.subf %5, %10 : vector<256x128xf32>
    %12 = arith.mulf %11, %11 : vector<256x128xf32>
    %cst_7 = arith.constant dense<0.000000e+00> : vector<128xf32>
    %13 = vector.multi_reduction <add>, %12, %cst_7 [0] : vector<256x128xf32> to vector<128xf32>
    %14 = vector.shape_cast %13 : vector<128xf32> to vector<1x128xf32>
    %cst_8 = arith.constant 2.560000e+02 : f32
    %15 = vector.broadcast %cst_8 : f32 to vector<1x128xf32>
    %16 = arith.divf %14, %15 : vector<1x128xf32>
    %17 = vector.broadcast %9 : vector<1x128xf32> to vector<256x128xf32>
    %18 = arith.subf %5, %17 : vector<256x128xf32>
    %cst_9 = arith.constant 9.99999974E-6 : f32
    %19 = vector.broadcast %cst_9 : f32 to vector<1x128xf32>
    %20 = arith.addf %16, %19 : vector<1x128xf32>
    %21 = math.rsqrt %20 : vector<1x128xf32>
    %22 = vector.broadcast %21 : vector<1x128xf32> to vector<256x128xf32>
    %23 = arith.mulf %18, %22 : vector<256x128xf32>
    %c0_10 = arith.constant 0 : index
    %c0_11 = arith.constant 0 : index
    %24 = vector.load %arg3[%c0_10, %c0_11] : memref<1x128xf32, #tpu.memory_space<vmem>>, vector<1x128xf32>
    %25 = vector.broadcast %24 : vector<1x128xf32> to vector<256x128xf32>
    %26 = arith.mulf %23, %25 : vector<256x128xf32>
    %c0_12 = arith.constant 0 : index
    %c0_13 = arith.constant 0 : index
    %27 = vector.load %arg4[%c0_12, %c0_13] : memref<1x128xf32, #tpu.memory_space<vmem>>, vector<1x128xf32>
    %28 = vector.broadcast %27 : vector<1x128xf32> to vector<256x128xf32>
    %29 = arith.addf %26, %28 : vector<256x128xf32>
    %cst_14 = arith.constant 0.000000e+00 : f32
    %30 = vector.broadcast %cst_14 : f32 to vector<256x128xf32>
    %31 = arith.maximumf %29, %30 : vector<256x128xf32>
    %32 = arith.truncf %31 : vector<256x128xf32> to vector<256x128xbf16>
    %c0_15 = arith.constant 0 : index
    %c0_16 = arith.constant 0 : index
    %33 = vector.load %arg5[%c0_15, %c0_16] : memref<128x128xbf16, #tpu.memory_space<vmem>>, vector<128x128xbf16>
    %cst_17 = arith.constant dense<0.000000e+00> : vector<256x128xf32>
    %34 = tpu.matmul %32, %33, %cst_17 {dimension_numbers = #tpu.dot_dimension_numbers<[1], [0], [0], [1], [0, 0, 1, 1], [], []>} : vector<256x128xbf16>, vector<128x128xbf16>, vector<256x128xf32> -> vector<256x128xf32>
    %c0_18 = arith.constant 0 : index
    %c0_19 = arith.constant 0 : index
    %35 = vector.load %arg6[%c0_18, %c0_19] : memref<1x128xf32, #tpu.memory_space<vmem>>, vector<1x128xf32>
    %36 = vector.broadcast %35 : vector<1x128xf32> to vector<256x128xf32>
    %37 = arith.addf %34, %36 : vector<256x128xf32>
    %cst_20 = arith.constant dense<0.000000e+00> : vector<128xf32>
    %38 = vector.multi_reduction <add>, %37, %cst_20 [0] : vector<256x128xf32> to vector<128xf32>
    %39 = vector.shape_cast %38 : vector<128xf32> to vector<1x128xf32>
    %cst_21 = arith.constant 2.560000e+02 : f32
    %40 = vector.broadcast %cst_21 : f32 to vector<1x128xf32>
    %41 = arith.divf %39, %40 : vector<1x128xf32>
    %42 = vector.broadcast %41 : vector<1x128xf32> to vector<256x128xf32>
    %43 = arith.subf %37, %42 : vector<256x128xf32>
    %44 = arith.mulf %43, %43 : vector<256x128xf32>
    %cst_22 = arith.constant dense<0.000000e+00> : vector<128xf32>
    %45 = vector.multi_reduction <add>, %44, %cst_22 [0] : vector<256x128xf32> to vector<128xf32>
    %46 = vector.shape_cast %45 : vector<128xf32> to vector<1x128xf32>
    %cst_23 = arith.constant 2.560000e+02 : f32
    %47 = vector.broadcast %cst_23 : f32 to vector<1x128xf32>
    %48 = arith.divf %46, %47 : vector<1x128xf32>
    %49 = vector.broadcast %41 : vector<1x128xf32> to vector<256x128xf32>
    %50 = arith.subf %37, %49 : vector<256x128xf32>
    %cst_24 = arith.constant 9.99999974E-6 : f32
    %51 = vector.broadcast %cst_24 : f32 to vector<1x128xf32>
    %52 = arith.addf %48, %51 : vector<1x128xf32>
    %53 = math.rsqrt %52 : vector<1x128xf32>
    %54 = vector.broadcast %53 : vector<1x128xf32> to vector<256x128xf32>
    %55 = arith.mulf %50, %54 : vector<256x128xf32>
    %c0_25 = arith.constant 0 : index
    %c0_26 = arith.constant 0 : index
    %56 = vector.load %arg7[%c0_25, %c0_26] : memref<1x128xf32, #tpu.memory_space<vmem>>, vector<1x128xf32>
    %57 = vector.broadcast %56 : vector<1x128xf32> to vector<256x128xf32>
    %58 = arith.mulf %55, %57 : vector<256x128xf32>
    %c0_27 = arith.constant 0 : index
    %c0_28 = arith.constant 0 : index
    %59 = vector.load %arg8[%c0_27, %c0_28] : memref<1x128xf32, #tpu.memory_space<vmem>>, vector<1x128xf32>
    %60 = vector.broadcast %59 : vector<1x128xf32> to vector<256x128xf32>
    %61 = arith.addf %58, %60 : vector<256x128xf32>
    %c0_29 = arith.constant 0 : index
    %c0_30 = arith.constant 0 : index
    %62 = vector.load %arg9[%c0_29, %c0_30] : memref<256x128xf32, #tpu.memory_space<vmem>>, vector<256x128xf32>
    tpu.vector_store %arg9[%c0_29, %c0_30], %61 {strides = array<i32>} : memref<256x128xf32, #tpu.memory_space<vmem>>, vector<256x128xf32>,
    return
  }
}

</mosaic_0001>

<llo_original>
// kernel: tpu_custom_call.1
$region0: #{tpu_custom_call.1}
  #allocation0 [shape = 'u32[]', space=smem, size = 0x4, offset = 0x4, fixed_abs, tag = 'smem constant byte address 0x4 - core index']
  #allocation1 [shape = 'u32[72,128]{1,0:T(1,128)}', space=vmem, size = 0x9000, scoped, tag = 'internal scratch']
  %s0 = inlined_call_operand.vmem [shape: bf16[256,64], index: 0, kind: input, shape index: {}]
  %s1 = inlined_call_operand.vmem [shape: bf16[64,128], index: 1, kind: input, shape index: {}]
  %s2 = inlined_call_operand.vmem [shape: f32[1,128], index: 2, kind: input, shape index: {}]
  %s3 = inlined_call_operand.vmem [shape: f32[1,128], index: 3, kind: input, shape index: {}]
  %s4 = inlined_call_operand.vmem [shape: f32[1,128], index: 4, kind: input, shape index: {}]
  %s5 = inlined_call_operand.vmem [shape: bf16[128,128], index: 5, kind: input, shape index: {}]
  %s6 = inlined_call_operand.vmem [shape: f32[1,128], index: 6, kind: input, shape index: {}]
  %s7 = inlined_call_operand.vmem [shape: f32[1,128], index: 7, kind: input, shape index: {}]
  %s8 = inlined_call_operand.vmem [shape: f32[1,128], index: 8, kind: input, shape index: {}]
  %s9 = inlined_call_operand.hbm [shape: f32[256,128], index: 9, kind: output, shape index: {}]
  %s10 = sld [smem:[#allocation0]]
  $region46: #{tpu_custom_call.1} parent=0
    _
  %s12 = ssub.s32 1, %s10
  %s13 = scalar_select 0, %s12, %s10
  $region1: #{tpu_custom_call.1} parent=0
    #allocation2 [shape = 'u8[131072]{0}', space=vmem, size = 0x20000, scoped, tag = 'output window, operand 0, single buffered']
    #allocation3 [shape = 's32[1]{0}', space=sflag, size = 0x4, scoped, tag = 'scoped memory for tpu_custom_call.1']
    %14 = vsyncpa [#allocation3], 0
    // Predicated region
    $region2: #{tpu_custom_call.1} parent=1 // pred_check
      _
    $region3: #{tpu_custom_call.1} parent=1 // pred_check_branch
      %16 = sbr.rel (0) target = $region5
    $region4: #{tpu_custom_call.1} parent=1 // pred_region
      _
    $region5: #{tpu_custom_call.1} parent=1 // pred_fallthru
      _
    // Predicated region
    $region6: #{tpu_custom_call.1} parent=1 // pred_check
      _
    $region7: #{tpu_custom_call.1} parent=1 // pred_check_branch
      %18 = sbr.rel (0) target = $region9
    $region8: #{tpu_custom_call.1} parent=1 // pred_region
      _
    $region9: #{tpu_custom_call.1} parent=1 // pred_fallthru
      _
    // Predicated region
    $region10: #{tpu_custom_call.1} parent=1 // pred_check
      _
    $region11: #{tpu_custom_call.1} parent=1 // pred_check_branch
      %20 = sbr.rel (0) target = $region13
    $region12: #{tpu_custom_call.1} parent=1 // pred_region
      _
    $region13: #{tpu_custom_call.1} parent=1 // pred_fallthru
      _
    // Predicated region
    $region14: #{tpu_custom_call.1} parent=1 // pred_check
      _
    $region15: #{tpu_custom_call.1} parent=1 // pred_check_branch
      %22 = sbr.rel (0) target = $region17
    $region16: #{tpu_custom_call.1} parent=1 // pred_region
      _
    $region17: #{tpu_custom_call.1} parent=1 // pred_fallthru
      _
    // Predicated region
    $region18: #{tpu_custom_call.1} parent=1 // pred_check
      _
    $region19: #{tpu_custom_call.1} parent=1 // pred_check_branch
      %24 = sbr.rel (0) target = $region21
    $region20: #{tpu_custom_call.1} parent=1 // pred_region
      _
    $region21: #{tpu_custom_call.1} parent=1 // pred_fallthru
      _
    // Predicated region
    $region22: #{tpu_custom_call.1} parent=1 // pred_check
      _
    $region23: #{tpu_custom_call.1} parent=1 // pred_check_branch
      %26 = sbr.rel (0) target = $region25
    $region24: #{tpu_custom_call.1} parent=1 // pred_region
      _
    $region25: #{tpu_custom_call.1} parent=1 // pred_fallthru
      _
    // Predicated region
    $region26: #{tpu_custom_call.1} parent=1 // pred_check
      _
    $region27: #{tpu_custom_call.1} parent=1 // pred_check_branch
      %28 = sbr.rel (0) target = $region29
    $region28: #{tpu_custom_call.1} parent=1 // pred_region
      _
    $region29: #{tpu_custom_call.1} parent=1 // pred_fallthru
      _
    // Predicated region
    $region30: #{tpu_custom_call.1} parent=1 // pred_check
      _
    $region31: #{tpu_custom_call.1} parent=1 // pred_check_branch
      %30 = sbr.rel (0) target = $region33
    $region32: #{tpu_custom_call.1} parent=1 // pred_region
      _
    $region33: #{tpu_custom_call.1} parent=1 // pred_fallthru
      _
    // Predicated region
    $region34: #{tpu_custom_call.1} parent=1 // pred_check
      _
    $region35: #{tpu_custom_call.1} parent=1 // pred_check_branch
      %32 = sbr.rel (0) target = $region37
    $region36: #{tpu_custom_call.1} parent=1 // pred_region
      _
    $region37: #{tpu_custom_call.1} parent=1 // pred_fallthru
      _
    %v34 = vld [vmem:[%s0] sm:$0xf]
    %v35 = vld [vmem:[%s0 + $0x4] sm:$0xf]
    %v36 = vld [vmem:[%s0 + $0x8] sm:$0xf]
    %v37 = vld [vmem:[%s0 + $0xc] sm:$0xf]
    %v38 = vld [vmem:[%s0 + $0x10] sm:$0xf]
    %v39 = vld [vmem:[%s0 + $0x14] sm:$0xf]
    %v40 = vld [vmem:[%s0 + $0x18] sm:$0xf]
    %v41 = vld [vmem:[%s0 + $0x1c] sm:$0xf]
    %v42 = vld [vmem:[%s0 + $0x20] sm:$0xf]
    %v43 = vld [vmem:[%s0 + $0x24] sm:$0xf]
    %v44 = vld [vmem:[%s0 + $0x28] sm:$0xf]
    %v45 = vld [vmem:[%s0 + $0x2c] sm:$0xf]
    %v46 = vld [vmem:[%s0 + $0x30] sm:$0xf]
    %v47 = vld [vmem:[%s0 + $0x34] sm:$0xf]
    %v48 = vld [vmem:[%s0 + $0x38] sm:$0xf]
    %v49 = vld [vmem:[%s0 + $0x3c] sm:$0xf]
    %v50 = vld [vmem:[%s0 + $0x40] sm:$0xf]
    %v51 = vld [vmem:[%s0 + $0x44] sm:$0xf]
    %v52 = vld [vmem:[%s0 + $0x48] sm:$0xf]
    %v53 = vld [vmem:[%s0 + $0x4c] sm:$0xf]
    %v54 = vld [vmem:[%s0 + $0x50] sm:$0xf]
    %v55 = vld [vmem:[%s0 + $0x54] sm:$0xf]
    %v56 = vld [vmem:[%s0 + $0x58] sm:$0xf]
    %v57 = vld [vmem:[%s0 + $0x5c] sm:$0xf]
    %v58 = vld [vmem:[%s0 + $0x60] sm:$0xf]
    %v59 = vld [vmem:[%s0 + $0x64] sm:$0xf]
    %v60 = vld [vmem:[%s0 + $0x68] sm:$0xf]
    %v61 = vld [vmem:[%s0 + $0x6c] sm:$0xf]
    %v62 = vld [vmem:[%s0 + $0x70] sm:$0xf]
    %v63 = vld [vmem:[%s0 + $0x74] sm:$0xf]
    %v64 = vld [vmem:[%s0 + $0x78] sm:$0xf]
    %v65 = vld [vmem:[%s0 + $0x7c] sm:$0xf]
    %v66 = vld [vmem:[%s1] sm:$0xf]
    %v67 = vld [vmem:[%s1 + $0x4] sm:$0xf]
    %v68 = vld [vmem:[%s1 + $0x8] sm:$0xf]
    %v69 = vld [vmem:[%s1 + $0xc] sm:$0xf]
    %v70 = vld [vmem:[%s1 + $0x10] sm:$0xf]
    %v71 = vld [vmem:[%s1 + $0x14] sm:$0xf]
    %v72 = vld [vmem:[%s1 + $0x18] sm:$0xf]
    %v73 = vld [vmem:[%s1 + $0x1c] sm:$0xf]
    %v74 = vld [vmem:[%s2] sm:$0x1]
    %v76 = vperm.slane %v74, 0
    %v110 = vunpack.c.l.b16 %v34
    %v111 = vunpack.c.l.b16 %v35
    %v112 = vunpack.c.l.b16 %v36
    %v113 = vunpack.c.l.b16 %v37
    %v114 = vunpack.c.l.b16 %v38
    %v115 = vunpack.c.l.b16 %v39
    %v116 = vunpack.c.l.b16 %v40
    %v117 = vunpack.c.l.b16 %v41
    %v118 = vunpack.c.l.b16 %v42
    %v119 = vunpack.c.l.b16 %v43
    %v120 = vunpack.c.l.b16 %v44
    %v121 = vunpack.c.l.b16 %v45
    %v122 = vunpack.c.l.b16 %v46
    %v123 = vunpack.c.l.b16 %v47
    %v124 = vunpack.c.l.b16 %v48
    %v125 = vunpack.c.l.b16 %v49
    %v126 = vunpack.c.l.b16 %v50
    %v127 = vunpack.c.l.b16 %v51
    %v128 = vunpack.c.l.b16 %v52
    %v129 = vunpack.c.l.b16 %v53
    %v130 = vunpack.c.l.b16 %v54
    %v131 = vunpack.c.l.b16 %v55
    %v132 = vunpack.c.l.b16 %v56
    %v133 = vunpack.c.l.b16 %v57
    %v134 = vunpack.c.l.b16 %v58
    %v135 = vunpack.c.l.b16 %v59
    %v136 = vunpack.c.l.b16 %v60
    %v137 = vunpack.c.l.b16 %v61
    %v138 = vunpack.c.l.b16 %v62
    %v139 = vunpack.c.l.b16 %v63
    %v140 = vunpack.c.l.b16 %v64
    %v141 = vunpack.c.l.b16 %v65
    %v142 = vpack.c.b16 %v111, %v110
    %v143 = vpack.c.b16 %v113, %v112
    %v144 = vpack.c.b16 %v115, %v114
    %v145 = vpack.c.b16 %v117, %v116
    %v146 = vpack.c.b16 %v119, %v118
    %v147 = vpack.c.b16 %v121, %v120
    %v148 = vpack.c.b16 %v123, %v122
    %v149 = vpack.c.b16 %v125, %v124
    %v150 = vpack.c.b16 %v127, %v126
    %v151 = vpack.c.b16 %v129, %v128
    %v152 = vpack.c.b16 %v131, %v130
    %v153 = vpack.c.b16 %v133, %v132
    %v154 = vpack.c.b16 %v135, %v134
    %v155 = vpack.c.b16 %v137, %v136
    %v156 = vpack.c.b16 %v139, %v138
    %v157 = vpack.c.b16 %v141, %v140
    %v166 = vunpack.c.l.b16 %v66
    %v167 = vunpack.c.l.b16 %v67
    %v168 = vunpack.c.l.b16 %v68
    %v169 = vunpack.c.l.b16 %v69
    %v170 = vunpack.c.l.b16 %v70
    %v171 = vunpack.c.l.b16 %v71
    %v172 = vunpack.c.l.b16 %v72
    %v173 = vunpack.c.l.b16 %v73
    %v174 = vpack.c.b16 %v167, %v166
    %v175 = vpack.c.b16 %v169, %v168
    %v176 = vpack.c.b16 %v171, %v170
    %v177 = vpack.c.b16 %v173, %v172
    %vm182 = vcmask 523264
    %v184 = vsel %vm182, %v142, 0
    %v187 = vsel %vm182, %v143, 0
    %v190 = vsel %vm182, %v144, 0
    %v193 = vsel %vm182, %v145, 0
    %v196 = vsel %vm182, %v146, 0
    %v199 = vsel %vm182, %v147, 0
    %v202 = vsel %vm182, %v148, 0
    %v205 = vsel %vm182, %v149, 0
    %v208 = vsel %vm182, %v150, 0
    %v211 = vsel %vm182, %v151, 0
    %v214 = vsel %vm182, %v152, 0
    %v217 = vsel %vm182, %v153, 0
    %v220 = vsel %vm182, %v154, 0
    %v223 = vsel %vm182, %v155, 0
    %v226 = vsel %vm182, %v156, 0
    %v229 = vsel %vm182, %v157, 0
    %231 = vmatpush.bf16.msra.mxu0 0
    %232 = vmatpush.bf16.msra.mxu0 0
    %233 = vmatpush.bf16.msra.mxu0 0
    %234 = vmatpush.bf16.msra.mxu0 0
    %235 = vmatpush.bf16.msra.mxu0 %v177
    %236 = vmatpush.bf16.msra.mxu0 %v176
    %237 = vmatpush.bf16.msra.mxu0 %v175
    %238 = vmatpush.bf16.msra.mxu0 %v174
    %239 = vmatmul.bf16.gmra.mxu0 %v184
    %v240 = vpop.f32.mrf.mxu0
    %v241 = vadd.f32 %v76, %v240
    %v242 = vpop.f32.mrf.mxu0
    %v243 = vadd.f32 %v76, %v242
    %244 = vmatmul.bf16.gmra.mxu0 %v187
    %v245 = vpop.f32.mrf.mxu0
    %v246 = vadd.f32 %v76, %v245
    %v247 = vpop.f32.mrf.mxu0
    %v248 = vadd.f32 %v76, %v247
    %249 = vmatmul.bf16.gmra.mxu0 %v190
    %v250 = vpop.f32.mrf.mxu0
    %v251 = vadd.f32 %v76, %v250
    %v252 = vpop.f32.mrf.mxu0
    %v253 = vadd.f32 %v76, %v252
    %254 = vmatmul.bf16.gmra.mxu0 %v193
    %v255 = vpop.f32.mrf.mxu0
    %v256 = vadd.f32 %v76, %v255
    %v257 = vpop.f32.mrf.mxu0
    %v258 = vadd.f32 %v76, %v257
    %259 = vmatmul.bf16.gmra.mxu0 %v196
    %v260 = vpop.f32.mrf.mxu0
    %v261 = vadd.f32 %v76, %v260
    %v262 = vpop.f32.mrf.mxu0
    %v263 = vadd.f32 %v76, %v262
    %264 = vmatmul.bf16.gmra.mxu0 %v199
    %v265 = vpop.f32.mrf.mxu0
    %v266 = vadd.f32 %v76, %v265
    %v267 = vpop.f32.mrf.mxu0
    %v268 = vadd.f32 %v76, %v267
    %269 = vmatmul.bf16.gmra.mxu0 %v202
    %v270 = vpop.f32.mrf.mxu0
    %v271 = vadd.f32 %v76, %v270
    %v272 = vpop.f32.mrf.mxu0
    %v273 = vadd.f32 %v76, %v272
    %274 = vmatmul.bf16.gmra.mxu0 %v205
    %v275 = vpop.f32.mrf.mxu0
    %v276 = vadd.f32 %v76, %v275
    %v277 = vpop.f32.mrf.mxu0
    %v278 = vadd.f32 %v76, %v277
    %279 = vmatmul.bf16.gmra.mxu0 %v208
    %v280 = vpop.f32.mrf.mxu0
    %v281 = vadd.f32 %v76, %v280
    %v282 = vpop.f32.mrf.mxu0
    %v283 = vadd.f32 %v76, %v282
    %284 = vmatmul.bf16.gmra.mxu0 %v211
    %v285 = vpop.f32.mrf.mxu0
    %v286 = vadd.f32 %v76, %v285
    %v287 = vpop.f32.mrf.mxu0
    %v288 = vadd.f32 %v76, %v287
    %289 = vmatmul.bf16.gmra.mxu0 %v214
    %v290 = vpop.f32.mrf.mxu0
    %v291 = vadd.f32 %v76, %v290
    %v292 = vpop.f32.mrf.mxu0
    %v293 = vadd.f32 %v76, %v292
    %294 = vmatmul.bf16.gmra.mxu0 %v217
    %v295 = vpop.f32.mrf.mxu0
    %v296 = vadd.f32 %v76, %v295
    %v297 = vpop.f32.mrf.mxu0
    %v298 = vadd.f32 %v76, %v297
    %299 = vmatmul.bf16.gmra.mxu0 %v220
    %v300 = vpop.f32.mrf.mxu0
    %v301 = vadd.f32 %v76, %v300
    %v302 = vpop.f32.mrf.mxu0
    %v303 = vadd.f32 %v76, %v302
    %304 = vmatmul.bf16.gmra.mxu0 %v223
    %v305 = vpop.f32.mrf.mxu0
    %v306 = vadd.f32 %v76, %v305
    %v307 = vpop.f32.mrf.mxu0
    %v308 = vadd.f32 %v76, %v307
    %309 = vmatmul.bf16.gmra.mxu0 %v226
    %v310 = vpop.f32.mrf.mxu0
    %v311 = vadd.f32 %v76, %v310
    %v312 = vpop.f32.mrf.mxu0
    %v313 = vadd.f32 %v76, %v312
    %314 = vmatmul.bf16.gmra.mxu0 %v229
    %v315 = vpop.f32.mrf.mxu0
    %v316 = vadd.f32 %v76, %v315
    %v317 = vpop.f32.mrf.mxu0
    %v318 = vadd.f32 %v76, %v317
    %319 = vdwg.mxu0
    %v320 = vadd.f32 %v241, %v243
    %v321 = vadd.f32 %v320, %v246
    %v322 = vadd.f32 %v321, %v248
    %v323 = vadd.f32 %v322, %v251
    %v324 = vadd.f32 %v323, %v253
    %v325 = vadd.f32 %v324, %v256
    %v326 = vadd.f32 %v325, %v258
    %v327 = vadd.f32 %v326, %v261
    %v328 = vadd.f32 %v327, %v263
    %v329 = vadd.f32 %v328, %v266
    %v330 = vadd.f32 %v329, %v268
    %v331 = vadd.f32 %v330, %v271
    %v332 = vadd.f32 %v331, %v273
    %v333 = vadd.f32 %v332, %v276
    %v334 = vadd.f32 %v333, %v278
    %v335 = vadd.f32 %v334, %v281
    %v336 = vadd.f32 %v335, %v283
    %v337 = vadd.f32 %v336, %v286
    %v338 = vadd.f32 %v337, %v288
    %v339 = vadd.f32 %v338, %v291
    %v340 = vadd.f32 %v339, %v293
    %v341 = vadd.f32 %v340, %v296
    %v342 = vadd.f32 %v341, %v298
    %v343 = vadd.f32 %v342, %v301
    %v344 = vadd.f32 %v343, %v303
    %v345 = vadd.f32 %v344, %v306
    %v346 = vadd.f32 %v345, %v308
    %v347 = vadd.f32 %v346, %v311
    %v348 = vadd.f32 %v347, %v313
    %v349 = vadd.f32 %v348, %v316
    %v350 = vadd.f32 %v349, %v318
    %v351 = vrot.slane %v350, 4
    %v352 = vadd.f32 %v350, %v351
    %v353 = vrot.slane %v352, 2
    %v354 = vadd.f32 %v352, %v353
    %v355 = vrot.slane %v354, 1
    %v356 = vadd.f32 %v354, %v355
    %v357 = vrcp.pop 256.0
    %v358 = vmul.f32 256.0, %v357
    %v359 = vsub.f32 1.0, %v358
    %v360 = vmul.f32 %v357, %v359
    %v361 = vadd.f32 %v357, %v360
    %vm362 = vweird.f32 %v357
    %v363 = vsel %vm362, %v357, %v361
    %v364 = vmul.f32 %v356, %v363
    %v365 = vsub.f32 %v241, %v364
    %v366 = vsub.f32 %v243, %v364
    %v367 = vsub.f32 %v246, %v364
    %v368 = vsub.f32 %v248, %v364
    %v369 = vsub.f32 %v251, %v364
    %v370 = vsub.f32 %v253, %v364
    %v371 = vsub.f32 %v256, %v364
    %v372 = vsub.f32 %v258, %v364
    %v373 = vsub.f32 %v261, %v364
    %v374 = vsub.f32 %v263, %v364
    %v375 = vsub.f32 %v266, %v364
    %v376 = vsub.f32 %v268, %v364
    %v377 = vsub.f32 %v271, %v364
    %v378 = vsub.f32 %v273, %v364
    %v379 = vsub.f32 %v276, %v364
    %v380 = vsub.f32 %v278, %v364
    %v381 = vsub.f32 %v281, %v364
    %v382 = vsub.f32 %v283, %v364
    %v383 = vsub.f32 %v286, %v364
    %v384 = vsub.f32 %v288, %v364
    %v385 = vsub.f32 %v291, %v364
    %v386 = vsub.f32 %v293, %v364
    %v387 = vsub.f32 %v296, %v364
    %v388 = vsub.f32 %v298, %v364
    %v389 = vsub.f32 %v301, %v364
    %v390 = vsub.f32 %v303, %v364
    %v391 = vsub.f32 %v306, %v364
    %v392 = vsub.f32 %v308, %v364
    %v393 = vsub.f32 %v311, %v364
    %v394 = vsub.f32 %v313, %v364
    %v395 = vsub.f32 %v316, %v364
    %v396 = vsub.f32 %v318, %v364
    %v397 = vmul.f32 %v365, %v365
    %v398 = vmul.f32 %v366, %v366
    %v399 = vmul.f32 %v367, %v367
    %v400 = vmul.f32 %v368, %v368
    %v401 = vmul.f32 %v369, %v369
    %v402 = vmul.f32 %v370, %v370
    %v403 = vmul.f32 %v371, %v371
    %v404 = vmul.f32 %v372, %v372
    %v405 = vmul.f32 %v373, %v373
    %v406 = vmul.f32 %v374, %v374
    %v407 = vmul.f32 %v375, %v375
    %v408 = vmul.f32 %v376, %v376
    %v409 = vmul.f32 %v377, %v377
    %v410 = vmul.f32 %v378, %v378
    %v411 = vmul.f32 %v379, %v379
    %v412 = vmul.f32 %v380, %v380
    %v413 = vmul.f32 %v381, %v381
    %v414 = vmul.f32 %v382, %v382
    %v415 = vmul.f32 %v383, %v383
    %v416 = vmul.f32 %v384, %v384
    %v417 = vmul.f32 %v385, %v385
    %v418 = vmul.f32 %v386, %v386
    %v419 = vmul.f32 %v387, %v387
    %v420 = vmul.f32 %v388, %v388
    %v421 = vmul.f32 %v389, %v389
    %v422 = vmul.f32 %v390, %v390
    %v423 = vmul.f32 %v391, %v391
    %v424 = vmul.f32 %v392, %v392
    %v425 = vmul.f32 %v393, %v393
    %v426 = vmul.f32 %v394, %v394
    %v427 = vmul.f32 %v395, %v395
    %v428 = vmul.f32 %v396, %v396
    %v429 = vadd.f32 %v397, %v398
    %v430 = vadd.f32 %v429, %v399
    %v431 = vadd.f32 %v430, %v400
    %v432 = vadd.f32 %v431, %v401
    %v433 = vadd.f32 %v432, %v402
    %v434 = vadd.f32 %v433, %v403
    %v435 = vadd.f32 %v434, %v404
    %v436 = vadd.f32 %v435, %v405
    %v437 = vadd.f32 %v436, %v406
    %v438 = vadd.f32 %v437, %v407
    %v439 = vadd.f32 %v438, %v408
    %v440 = vadd.f32 %v439, %v409
    %v441 = vadd.f32 %v440, %v410
    %v442 = vadd.f32 %v441, %v411
    %v443 = vadd.f32 %v442, %v412
    %v444 = vadd.f32 %v443, %v413
    %v445 = vadd.f32 %v444, %v414
    %v446 = vadd.f32 %v445, %v415
    %v447 = vadd.f32 %v446, %v416
    %v448 = vadd.f32 %v447, %v417
    %v449 = vadd.f32 %v448, %v418
    %v450 = vadd.f32 %v449, %v419
    %v451 = vadd.f32 %v450, %v420
    %v452 = vadd.f32 %v451, %v421
    %v453 = vadd.f32 %v452, %v422
    %v454 = vadd.f32 %v453, %v423
    %v455 = vadd.f32 %v454, %v424
    %v456 = vadd.f32 %v455, %v425
    %v457 = vadd.f32 %v456, %v426
    %v458 = vadd.f32 %v457, %v427
    %v459 = vadd.f32 %v458, %v428
    %v460 = vrot.slane %v459, 4
    %v461 = vadd.f32 %v459, %v460
    %v462 = vrot.slane %v461, 2
    %v463 = vadd.f32 %v461, %v462
    %v464 = vrot.slane %v463, 1
    %v465 = vadd.f32 %v463, %v464
    %v466 = vmul.f32 %v465, %v363
    %v467 = vadd.f32 %v466, 1e-05
    %v468 = vrsqrt.pop %v467
    %v469 = vmul.f32 %v468, %v467
    %v470 = vmul.f32 %v469, %v468
    %v471 = vmul.f32 0.5, %v470
    %v472 = vsub.f32 1.5, %v471
    %v473 = vmul.f32 %v468, %v472
    %vm474 = vweird.f32 %v467
    %vm475 = vweird.f32 %v468
    %vm476 = vmor %vm474, %vm475
    %v477 = vsel %vm476, %v468, %v473
    %v478 = vmul.f32 %v365, %v477
    %v479 = vmul.f32 %v366, %v477
    %v480 = vmul.f32 %v367, %v477
    %v481 = vmul.f32 %v368, %v477
    %v482 = vmul.f32 %v369, %v477
    %v483 = vmul.f32 %v370, %v477
    %v484 = vmul.f32 %v371, %v477
    %v485 = vmul.f32 %v372, %v477
    %v486 = vmul.f32 %v373, %v477
    %v487 = vmul.f32 %v374, %v477
    %v488 = vmul.f32 %v375, %v477
    %v489 = vmul.f32 %v376, %v477
    %v490 = vmul.f32 %v377, %v477
    %v491 = vmul.f32 %v378, %v477
    %v492 = vmul.f32 %v379, %v477
    %v493 = vmul.f32 %v380, %v477
    %v494 = vmul.f32 %v381, %v477
    %v495 = vmul.f32 %v382, %v477
    %v496 = vmul.f32 %v383, %v477
    %v497 = vmul.f32 %v384, %v477
    %v498 = vmul.f32 %v385, %v477
    %v499 = vmul.f32 %v386, %v477
    %v500 = vmul.f32 %v387, %v477
    %v501 = vmul.f32 %v388, %v477
    %v502 = vmul.f32 %v389, %v477
    %v503 = vmul.f32 %v390, %v477
    %v504 = vmul.f32 %v391, %v477
    %v505 = vmul.f32 %v392, %v477
    %v506 = vmul.f32 %v393, %v477
    %v507 = vmul.f32 %v394, %v477
    %v508 = vmul.f32 %v395, %v477
    %v509 = vmul.f32 %v396, %v477
    %v510 = vld [vmem:[%s3] sm:$0x1]
    %v512 = vperm.slane %v510, 0
    %v514 = vmul.f32 %v478, %v512
    %v515 = vmul.f32 %v479, %v512
    %v516 = vmul.f32 %v480, %v512
    %v517 = vmul.f32 %v481, %v512
    %v518 = vmul.f32 %v482, %v512
    %v519 = vmul.f32 %v483, %v512
    %v520 = vmul.f32 %v484, %v512
    %v521 = vmul.f32 %v485, %v512
    %v522 = vmul.f32 %v486, %v512
    %v523 = vmul.f32 %v487, %v512
    %v524 = vmul.f32 %v488, %v512
    %v525 = vmul.f32 %v489, %v512
    %v526 = vmul.f32 %v490, %v512
    %v527 = vmul.f32 %v491, %v512
    %v528 = vmul.f32 %v492, %v512
    %v529 = vmul.f32 %v493, %v512
    %v530 = vmul.f32 %v494, %v512
    %v531 = vmul.f32 %v495, %v512
    %v532 = vmul.f32 %v496, %v512
    %v533 = vmul.f32 %v497, %v512
    %v534 = vmul.f32 %v498, %v512
    %v535 = vmul.f32 %v499, %v512
    %v536 = vmul.f32 %v500, %v512
    %v537 = vmul.f32 %v501, %v512
    %v538 = vmul.f32 %v502, %v512
    %v539 = vmul.f32 %v503, %v512
    %v540 = vmul.f32 %v504, %v512
    %v541 = vmul.f32 %v505, %v512
    %v542 = vmul.f32 %v506, %v512
    %v543 = vmul.f32 %v507, %v512
    %v544 = vmul.f32 %v508, %v512
    %v545 = vmul.f32 %v509, %v512
    %v546 = vld [vmem:[%s4] sm:$0x1]
    %v548 = vperm.slane %v546, 0
    %v550 = vadd.f32 %v514, %v548
    %v551 = vadd.f32 %v515, %v548
    %v552 = vadd.f32 %v516, %v548
    %v553 = vadd.f32 %v517, %v548
    %v554 = vadd.f32 %v518, %v548
    %v555 = vadd.f32 %v519, %v548
    %v556 = vadd.f32 %v520, %v548
    %v557 = vadd.f32 %v521, %v548
    %v558 = vadd.f32 %v522, %v548
    %v559 = vadd.f32 %v523, %v548
    %v560 = vadd.f32 %v524, %v548
    %v561 = vadd.f32 %v525, %v548
    %v562 = vadd.f32 %v526, %v548
    %v563 = vadd.f32 %v527, %v548
    %v564 = vadd.f32 %v528, %v548
    %v565 = vadd.f32 %v529, %v548
    %v566 = vadd.f32 %v530, %v548
    %v567 = vadd.f32 %v531, %v548
    %v568 = vadd.f32 %v532, %v548
    %v569 = vadd.f32 %v533, %v548
    %v570 = vadd.f32 %v534, %v548
    %v571 = vadd.f32 %v535, %v548
    %v572 = vadd.f32 %v536, %v548
    %v573 = vadd.f32 %v537, %v548
    %v574 = vadd.f32 %v538, %v548
    %v575 = vadd.f32 %v539, %v548
    %v576 = vadd.f32 %v540, %v548
    %v577 = vadd.f32 %v541, %v548
    %v578 = vadd.f32 %v542, %v548
    %v579 = vadd.f32 %v543, %v548
    %v580 = vadd.f32 %v544, %v548
    %v581 = vadd.f32 %v545, %v548
    %v582 = vmax.f32 %v550, 0.0
    %v583 = vmax.f32 %v551, 0.0
    %v584 = vmax.f32 %v552, 0.0
    %v585 = vmax.f32 %v553, 0.0
    %v586 = vmax.f32 %v554, 0.0
    %v587 = vmax.f32 %v555, 0.0
    %v588 = vmax.f32 %v556, 0.0
    %v589 = vmax.f32 %v557, 0.0
    %v590 = vmax.f32 %v558, 0.0
    %v591 = vmax.f32 %v559, 0.0
    %v592 = vmax.f32 %v560, 0.0
    %v593 = vmax.f32 %v561, 0.0
    %v594 = vmax.f32 %v562, 0.0
    %v595 = vmax.f32 %v563, 0.0
    %v596 = vmax.f32 %v564, 0.0
    %v597 = vmax.f32 %v565, 0.0
    %v598 = vmax.f32 %v566, 0.0
    %v599 = vmax.f32 %v567, 0.0
    %v600 = vmax.f32 %v568, 0.0
    %v601 = vmax.f32 %v569, 0.0
    %v602 = vmax.f32 %v570, 0.0
    %v603 = vmax.f32 %v571, 0.0
    %v604 = vmax.f32 %v572, 0.0
    %v605 = vmax.f32 %v573, 0.0
    %v606 = vmax.f32 %v574, 0.0
    %v607 = vmax.f32 %v575, 0.0
    %v608 = vmax.f32 %v576, 0.0
    %v609 = vmax.f32 %v577, 0.0
    %v610 = vmax.f32 %v578, 0.0
    %v611 = vmax.f32 %v579, 0.0
    %v612 = vmax.f32 %v580, 0.0
    %v613 = vmax.f32 %v581, 0.0
    %v614 = vpack.c.bf16 %v583, %v582
    %v615 = vpack.c.bf16 %v585, %v584
    %v616 = vpack.c.bf16 %v587, %v586
    %v617 = vpack.c.bf16 %v589, %v588
    %v618 = vpack.c.bf16 %v591, %v590
    %v619 = vpack.c.bf16 %v593, %v592
    %v620 = vpack.c.bf16 %v595, %v594
    %v621 = vpack.c.bf16 %v597, %v596
    %v622 = vpack.c.bf16 %v599, %v598
    %v623 = vpack.c.bf16 %v601, %v600
    %v624 = vpack.c.bf16 %v603, %v602
    %v625 = vpack.c.bf16 %v605, %v604
    %v626 = vpack.c.bf16 %v607, %v606
    %v627 = vpack.c.bf16 %v609, %v608
    %v628 = vpack.c.bf16 %v611, %v610
    %v629 = vpack.c.bf16 %v613, %v612
    %v630 = vld [vmem:[%s5] sm:$0xf]
    %v631 = vld [vmem:[%s5 + $0x4] sm:$0xf]
    %v632 = vld [vmem:[%s5 + $0x8] sm:$0xf]
    %v633 = vld [vmem:[%s5 + $0xc] sm:$0xf]
    %v634 = vld [vmem:[%s5 + $0x10] sm:$0xf]
    %v635 = vld [vmem:[%s5 + $0x14] sm:$0xf]
    %v636 = vld [vmem:[%s5 + $0x18] sm:$0xf]
    %v637 = vld [vmem:[%s5 + $0x1c] sm:$0xf]
    %v638 = vld [vmem:[%s5 + $0x20] sm:$0xf]
    %v639 = vld [vmem:[%s5 + $0x24] sm:$0xf]
    %v640 = vld [vmem:[%s5 + $0x28] sm:$0xf]
    %v641 = vld [vmem:[%s5 + $0x2c] sm:$0xf]
    %v642 = vld [vmem:[%s5 + $0x30] sm:$0xf]
    %v643 = vld [vmem:[%s5 + $0x34] sm:$0xf]
    %v644 = vld [vmem:[%s5 + $0x38] sm:$0xf]
    %v645 = vld [vmem:[%s5 + $0x3c] sm:$0xf]
    %v646 = vld [vmem:[%s6] sm:$0x1]
    %v648 = vperm.slane %v646, 0
    %v666 = vunpack.c.l.b16 %v630
    %v667 = vunpack.c.l.b16 %v631
    %v668 = vunpack.c.l.b16 %v632
    %v669 = vunpack.c.l.b16 %v633
    %v670 = vunpack.c.l.b16 %v634
    %v671 = vunpack.c.l.b16 %v635
    %v672 = vunpack.c.l.b16 %v636
    %v673 = vunpack.c.l.b16 %v637
    %v674 = vunpack.c.l.b16 %v638
    %v675 = vunpack.c.l.b16 %v639
    %v676 = vunpack.c.l.b16 %v640
    %v677 = vunpack.c.l.b16 %v641
    %v678 = vunpack.c.l.b16 %v642
    %v679 = vunpack.c.l.b16 %v643
    %v680 = vunpack.c.l.b16 %v644
    %v681 = vunpack.c.l.b16 %v645
    %v682 = vpack.c.b16 %v667, %v666
    %v683 = vpack.c.b16 %v669, %v668
    %v684 = vpack.c.b16 %v671, %v670
    %v685 = vpack.c.b16 %v673, %v672
    %v686 = vpack.c.b16 %v675, %v674
    %v687 = vpack.c.b16 %v677, %v676
    %v688 = vpack.c.b16 %v679, %v678
    %v689 = vpack.c.b16 %v681, %v680
    %698 = vmatpush.bf16.msra.mxu0 %v689
    %699 = vmatpush.bf16.msra.mxu0 %v688
    %700 = vmatpush.bf16.msra.mxu0 %v687
    %701 = vmatpush.bf16.msra.mxu0 %v686
    %702 = vmatpush.bf16.msra.mxu0 %v685
    %703 = vmatpush.bf16.msra.mxu0 %v684
    %704 = vmatpush.bf16.msra.mxu0 %v683
    %705 = vmatpush.bf16.msra.mxu0 %v682
    %706 = vmatmul.bf16.gmra.mxu0 %v614
    %v707 = vpop.f32.mrf.mxu0
    %v708 = vadd.f32 %v648, %v707
    %v709 = vpop.f32.mrf.mxu0
    %v710 = vadd.f32 %v648, %v709
    %711 = vmatmul.bf16.gmra.mxu0 %v615
    %v712 = vpop.f32.mrf.mxu0
    %v713 = vadd.f32 %v648, %v712
    %v714 = vpop.f32.mrf.mxu0
    %v715 = vadd.f32 %v648, %v714
    %716 = vmatmul.bf16.gmra.mxu0 %v616
    %v717 = vpop.f32.mrf.mxu0
    %v718 = vadd.f32 %v648, %v717
    %v719 = vpop.f32.mrf.mxu0
    %v720 = vadd.f32 %v648, %v719
    %721 = vmatmul.bf16.gmra.mxu0 %v617
    %v722 = vpop.f32.mrf.mxu0
    %v723 = vadd.f32 %v648, %v722
    %v724 = vpop.f32.mrf.mxu0
    %v725 = vadd.f32 %v648, %v724
    %726 = vmatmul.bf16.gmra.mxu0 %v618
    %v727 = vpop.f32.mrf.mxu0
    %v728 = vadd.f32 %v648, %v727
    %v729 = vpop.f32.mrf.mxu0
    %v730 = vadd.f32 %v648, %v729
    %731 = vmatmul.bf16.gmra.mxu0 %v619
    %v732 = vpop.f32.mrf.mxu0
    %v733 = vadd.f32 %v648, %v732
    %v734 = vpop.f32.mrf.mxu0
    %v735 = vadd.f32 %v648, %v734
    %736 = vmatmul.bf16.gmra.mxu0 %v620
    %v737 = vpop.f32.mrf.mxu0
    %v738 = vadd.f32 %v648, %v737
    %v739 = vpop.f32.mrf.mxu0
    %v740 = vadd.f32 %v648, %v739
    %741 = vmatmul.bf16.gmra.mxu0 %v621
    %v742 = vpop.f32.mrf.mxu0
    %v743 = vadd.f32 %v648, %v742
    %v744 = vpop.f32.mrf.mxu0
    %v745 = vadd.f32 %v648, %v744
    %746 = vmatmul.bf16.gmra.mxu0 %v622
    %v747 = vpop.f32.mrf.mxu0
    %v748 = vadd.f32 %v648, %v747
    %v749 = vpop.f32.mrf.mxu0
    %v750 = vadd.f32 %v648, %v749
    %751 = vmatmul.bf16.gmra.mxu0 %v623
    %v752 = vpop.f32.mrf.mxu0
    %v753 = vadd.f32 %v648, %v752
    %v754 = vpop.f32.mrf.mxu0
    %v755 = vadd.f32 %v648, %v754
    %756 = vmatmul.bf16.gmra.mxu0 %v624
    %v757 = vpop.f32.mrf.mxu0
    %v758 = vadd.f32 %v648, %v757
    %v759 = vpop.f32.mrf.mxu0
    %v760 = vadd.f32 %v648, %v759
    %761 = vmatmul.bf16.gmra.mxu0 %v625
    %v762 = vpop.f32.mrf.mxu0
    %v763 = vadd.f32 %v648, %v762
    %v764 = vpop.f32.mrf.mxu0
    %v765 = vadd.f32 %v648, %v764
    %766 = vmatmul.bf16.gmra.mxu0 %v626
    %v767 = vpop.f32.mrf.mxu0
    %v768 = vadd.f32 %v648, %v767
    %v769 = vpop.f32.mrf.mxu0
    %v770 = vadd.f32 %v648, %v769
    %771 = vmatmul.bf16.gmra.mxu0 %v627
    %v772 = vpop.f32.mrf.mxu0
    %v773 = vadd.f32 %v648, %v772
    %v774 = vpop.f32.mrf.mxu0
    %v775 = vadd.f32 %v648, %v774
    %776 = vmatmul.bf16.gmra.mxu0 %v628
    %v777 = vpop.f32.mrf.mxu0
    %v778 = vadd.f32 %v648, %v777
    %v779 = vpop.f32.mrf.mxu0
    %v780 = vadd.f32 %v648, %v779
    %781 = vmatmul.bf16.gmra.mxu0 %v629
    %v782 = vpop.f32.mrf.mxu0
    %v783 = vadd.f32 %v648, %v782
    %v784 = vpop.f32.mrf.mxu0
    %v785 = vadd.f32 %v648, %v784
    %786 = vdwg.mxu0
    %v787 = vadd.f32 %v708, %v710
    %v788 = vadd.f32 %v787, %v713
    %v789 = vadd.f32 %v788, %v715
    %v790 = vadd.f32 %v789, %v718
    %v791 = vadd.f32 %v790, %v720
    %v792 = vadd.f32 %v791, %v723
    %v793 = vadd.f32 %v792, %v725
    %v794 = vadd.f32 %v793, %v728
    %v795 = vadd.f32 %v794, %v730
    %v796 = vadd.f32 %v795, %v733
    %v797 = vadd.f32 %v796, %v735
    %v798 = vadd.f32 %v797, %v738
    %v799 = vadd.f32 %v798, %v740
    %v800 = vadd.f32 %v799, %v743
    %v801 = vadd.f32 %v800, %v745
    %v802 = vadd.f32 %v801, %v748
    %v803 = vadd.f32 %v802, %v750
    %v804 = vadd.f32 %v803, %v753
    %v805 = vadd.f32 %v804, %v755
    %v806 = vadd.f32 %v805, %v758
    %v807 = vadd.f32 %v806, %v760
    %v808 = vadd.f32 %v807, %v763
    %v809 = vadd.f32 %v808, %v765
    %v810 = vadd.f32 %v809, %v768
    %v811 = vadd.f32 %v810, %v770
    %v812 = vadd.f32 %v811, %v773
    %v813 = vadd.f32 %v812, %v775
    %v814 = vadd.f32 %v813, %v778
    %v815 = vadd.f32 %v814, %v780
    %v816 = vadd.f32 %v815, %v783
    %v817 = vadd.f32 %v816, %v785
    %v818 = vrot.slane %v817, 4
    %v819 = vadd.f32 %v817, %v818
    %v820 = vrot.slane %v819, 2
    %v821 = vadd.f32 %v819, %v820
    %v822 = vrot.slane %v821, 1
    %v823 = vadd.f32 %v821, %v822
    %v824 = vmul.f32 %v823, %v363
    %v825 = vsub.f32 %v708, %v824
    %v826 = vsub.f32 %v710, %v824
    %v827 = vsub.f32 %v713, %v824
    %v828 = vsub.f32 %v715, %v824
    %v829 = vsub.f32 %v718, %v824
    %v830 = vsub.f32 %v720, %v824
    %v831 = vsub.f32 %v723, %v824
    %v832 = vsub.f32 %v725, %v824
    %v833 = vsub.f32 %v728, %v824
    %v834 = vsub.f32 %v730, %v824
    %v835 = vsub.f32 %v733, %v824
    %v836 = vsub.f32 %v735, %v824
    %v837 = vsub.f32 %v738, %v824
    %v838 = vsub.f32 %v740, %v824
    %v839 = vsub.f32 %v743, %v824
    %v840 = vsub.f32 %v745, %v824
    %v841 = vsub.f32 %v748, %v824
    %v842 = vsub.f32 %v750, %v824
    %v843 = vsub.f32 %v753, %v824
    %v844 = vsub.f32 %v755, %v824
    %v845 = vsub.f32 %v758, %v824
    %v846 = vsub.f32 %v760, %v824
    %v847 = vsub.f32 %v763, %v824
    %v848 = vsub.f32 %v765, %v824
    %v849 = vsub.f32 %v768, %v824
    %v850 = vsub.f32 %v770, %v824
    %v851 = vsub.f32 %v773, %v824
    %v852 = vsub.f32 %v775, %v824
    %v853 = vsub.f32 %v778, %v824
    %v854 = vsub.f32 %v780, %v824
    %v855 = vsub.f32 %v783, %v824
    %v856 = vsub.f32 %v785, %v824
    %v857 = vmul.f32 %v825, %v825
    %v858 = vmul.f32 %v826, %v826
    %v859 = vmul.f32 %v827, %v827
    %v860 = vmul.f32 %v828, %v828
    %v861 = vmul.f32 %v829, %v829
    %v862 = vmul.f32 %v830, %v830
    %v863 = vmul.f32 %v831, %v831
    %v864 = vmul.f32 %v832, %v832
    %v865 = vmul.f32 %v833, %v833
    %v866 = vmul.f32 %v834, %v834
    %v867 = vmul.f32 %v835, %v835
    %v868 = vmul.f32 %v836, %v836
    %v869 = vmul.f32 %v837, %v837
    %v870 = vmul.f32 %v838, %v838
    %v871 = vmul.f32 %v839, %v839
    %v872 = vmul.f32 %v840, %v840
    %v873 = vmul.f32 %v841, %v841
    %v874 = vmul.f32 %v842, %v842
    %v875 = vmul.f32 %v843, %v843
    %v876 = vmul.f32 %v844, %v844
    %v877 = vmul.f32 %v845, %v845
    %v878 = vmul.f32 %v846, %v846
    %v879 = vmul.f32 %v847, %v847
    %v880 = vmul.f32 %v848, %v848
    %v881 = vmul.f32 %v849, %v849
    %v882 = vmul.f32 %v850, %v850
    %v883 = vmul.f32 %v851, %v851
    %v884 = vmul.f32 %v852, %v852
    %v885 = vmul.f32 %v853, %v853
    %v886 = vmul.f32 %v854, %v854
    %v887 = vmul.f32 %v855, %v855
    %v888 = vmul.f32 %v856, %v856
    %v889 = vadd.f32 %v857, %v858
    %v890 = vadd.f32 %v889, %v859
    %v891 = vadd.f32 %v890, %v860
    %v892 = vadd.f32 %v891, %v861
    %v893 = vadd.f32 %v892, %v862
    %v894 = vadd.f32 %v893, %v863
    %v895 = vadd.f32 %v894, %v864
    %v896 = vadd.f32 %v895, %v865
    %v897 = vadd.f32 %v896, %v866
    %v898 = vadd.f32 %v897, %v867
    %v899 = vadd.f32 %v898, %v868
    %v900 = vadd.f32 %v899, %v869
    %v901 = vadd.f32 %v900, %v870
    %v902 = vadd.f32 %v901, %v871
    %v903 = vadd.f32 %v902, %v872
    %v904 = vadd.f32 %v903, %v873
    %v905 = vadd.f32 %v904, %v874
    %v906 = vadd.f32 %v905, %v875
    %v907 = vadd.f32 %v906, %v876
    %v908 = vadd.f32 %v907, %v877
    %v909 = vadd.f32 %v908, %v878
    %v910 = vadd.f32 %v909, %v879
    %v911 = vadd.f32 %v910, %v880
    %v912 = vadd.f32 %v911, %v881
    %v913 = vadd.f32 %v912, %v882
    %v914 = vadd.f32 %v913, %v883
    %v915 = vadd.f32 %v914, %v884
    %v916 = vadd.f32 %v915, %v885
    %v917 = vadd.f32 %v916, %v886
    %v918 = vadd.f32 %v917, %v887
    %v919 = vadd.f32 %v918, %v888
    %v920 = vrot.slane %v919, 4
    %v921 = vadd.f32 %v919, %v920
    %v922 = vrot.slane %v921, 2
    %v923 = vadd.f32 %v921, %v922
    %v924 = vrot.slane %v923, 1
    %v925 = vadd.f32 %v923, %v924
    %v926 = vmul.f32 %v925, %v363
    %v927 = vadd.f32 %v926, 1e-05
    %v928 = vrsqrt.pop %v927
    %v929 = vmul.f32 %v928, %v927
    %v930 = vmul.f32 %v929, %v928
    %v931 = vmul.f32 0.5, %v930
    %v932 = vsub.f32 1.5, %v931
    %v933 = vmul.f32 %v928, %v932
    %vm934 = vweird.f32 %v927
    %vm935 = vweird.f32 %v928
    %vm936 = vmor %vm934, %vm935
    %v937 = vsel %vm936, %v928, %v933
    %v938 = vmul.f32 %v825, %v937
    %v939 = vmul.f32 %v826, %v937
    %v940 = vmul.f32 %v827, %v937
    %v941 = vmul.f32 %v828, %v937
    %v942 = vmul.f32 %v829, %v937
    %v943 = vmul.f32 %v830, %v937
    %v944 = vmul.f32 %v831, %v937
    %v945 = vmul.f32 %v832, %v937
    %v946 = vmul.f32 %v833, %v937
    %v947 = vmul.f32 %v834, %v937
    %v948 = vmul.f32 %v835, %v937
    %v949 = vmul.f32 %v836, %v937
    %v950 = vmul.f32 %v837, %v937
    %v951 = vmul.f32 %v838, %v937
    %v952 = vmul.f32 %v839, %v937
    %v953 = vmul.f32 %v840, %v937
    %v954 = vmul.f32 %v841, %v937
    %v955 = vmul.f32 %v842, %v937
    %v956 = vmul.f32 %v843, %v937
    %v957 = vmul.f32 %v844, %v937
    %v958 = vmul.f32 %v845, %v937
    %v959 = vmul.f32 %v846, %v937
    %v960 = vmul.f32 %v847, %v937
    %v961 = vmul.f32 %v848, %v937
    %v962 = vmul.f32 %v849, %v937
    %v963 = vmul.f32 %v850, %v937
    %v964 = vmul.f32 %v851, %v937
    %v965 = vmul.f32 %v852, %v937
    %v966 = vmul.f32 %v853, %v937
    %v967 = vmul.f32 %v854, %v937
    %v968 = vmul.f32 %v855, %v937
    %v969 = vmul.f32 %v856, %v937
    %v970 = vld [vmem:[%s7] sm:$0x1]
    %v972 = vperm.slane %v970, 0
    %v974 = vmul.f32 %v938, %v972
    %v975 = vmul.f32 %v939, %v972
    %v976 = vmul.f32 %v940, %v972
    %v977 = vmul.f32 %v941, %v972
    %v978 = vmul.f32 %v942, %v972
    %v979 = vmul.f32 %v943, %v972
    %v980 = vmul.f32 %v944, %v972
    %v981 = vmul.f32 %v945, %v972
    %v982 = vmul.f32 %v946, %v972
    %v983 = vmul.f32 %v947, %v972
    %v984 = vmul.f32 %v948, %v972
    %v985 = vmul.f32 %v949, %v972
    %v986 = vmul.f32 %v950, %v972
    %v987 = vmul.f32 %v951, %v972
    %v988 = vmul.f32 %v952, %v972
    %v989 = vmul.f32 %v953, %v972
    %v990 = vmul.f32 %v954, %v972
    %v991 = vmul.f32 %v955, %v972
    %v992 = vmul.f32 %v956, %v972
    %v993 = vmul.f32 %v957, %v972
    %v994 = vmul.f32 %v958, %v972
    %v995 = vmul.f32 %v959, %v972
    %v996 = vmul.f32 %v960, %v972
    %v997 = vmul.f32 %v961, %v972
    %v998 = vmul.f32 %v962, %v972
    %v999 = vmul.f32 %v963, %v972
    %v1000 = vmul.f32 %v964, %v972
    %v1001 = vmul.f32 %v965, %v972
    %v1002 = vmul.f32 %v966, %v972
    %v1003 = vmul.f32 %v967, %v972
    %v1004 = vmul.f32 %v968, %v972
    %v1005 = vmul.f32 %v969, %v972
    %v1006 = vld [vmem:[%s8] sm:$0x1]
    %v1008 = vperm.slane %v1006, 0
    %v1010 = vadd.f32 %v974, %v1008
    %v1011 = vadd.f32 %v975, %v1008
    %v1012 = vadd.f32 %v976, %v1008
    %v1013 = vadd.f32 %v977, %v1008
    %v1014 = vadd.f32 %v978, %v1008
    %v1015 = vadd.f32 %v979, %v1008
    %v1016 = vadd.f32 %v980, %v1008
    %v1017 = vadd.f32 %v981, %v1008
    %v1018 = vadd.f32 %v982, %v1008
    %v1019 = vadd.f32 %v983, %v1008
    %v1020 = vadd.f32 %v984, %v1008
    %v1021 = vadd.f32 %v985, %v1008
    %v1022 = vadd.f32 %v986, %v1008
    %v1023 = vadd.f32 %v987, %v1008
    %v1024 = vadd.f32 %v988, %v1008
    %v1025 = vadd.f32 %v989, %v1008
    %v1026 = vadd.f32 %v990, %v1008
    %v1027 = vadd.f32 %v991, %v1008
    %v1028 = vadd.f32 %v992, %v1008
    %v1029 = vadd.f32 %v993, %v1008
    %v1030 = vadd.f32 %v994, %v1008
    %v1031 = vadd.f32 %v995, %v1008
    %v1032 = vadd.f32 %v996, %v1008
    %v1033 = vadd.f32 %v997, %v1008
    %v1034 = vadd.f32 %v998, %v1008
    %v1035 = vadd.f32 %v999, %v1008
    %v1036 = vadd.f32 %v1000, %v1008
    %v1037 = vadd.f32 %v1001, %v1008
    %v1038 = vadd.f32 %v1002, %v1008
    %v1039 = vadd.f32 %v1003, %v1008
    %v1040 = vadd.f32 %v1004, %v1008
    %v1041 = vadd.f32 %v1005, %v1008
    %1042 = vst [vmem:[#allocation2] sm:$0xff] %v1010
    %1043 = vst [vmem:[#allocation2 + $0x8] sm:$0xff] %v1011
    %1044 = vst [vmem:[#allocation2 + $0x10] sm:$0xff] %v1012
    %1045 = vst [vmem:[#allocation2 + $0x18] sm:$0xff] %v1013
    %1046 = vst [vmem:[#allocation2 + $0x20] sm:$0xff] %v1014
    %1047 = vst [vmem:[#allocation2 + $0x28] sm:$0xff] %v1015
    %1048 = vst [vmem:[#allocation2 + $0x30] sm:$0xff] %v1016
    %1049 = vst [vmem:[#allocation2 + $0x38] sm:$0xff] %v1017
    %1050 = vst [vmem:[#allocation2 + $0x40] sm:$0xff] %v1018
    %1051 = vst [vmem:[#allocation2 + $0x48] sm:$0xff] %v1019
    %1052 = vst [vmem:[#allocation2 + $0x50] sm:$0xff] %v1020
    %1053 = vst [vmem:[#allocation2 + $0x58] sm:$0xff] %v1021
    %1054 = vst [vmem:[#allocation2 + $0x60] sm:$0xff] %v1022
    %1055 = vst [vmem:[#allocation2 + $0x68] sm:$0xff] %v1023
    %1056 = vst [vmem:[#allocation2 + $0x70] sm:$0xff] %v1024
    %1057 = vst [vmem:[#allocation2 + $0x78] sm:$0xff] %v1025
    %1058 = vst [vmem:[#allocation2 + $0x80] sm:$0xff] %v1026
    %1059 = vst [vmem:[#allocation2 + $0x88] sm:$0xff] %v1027
    %1060 = vst [vmem:[#allocation2 + $0x90] sm:$0xff] %v1028
    %1061 = vst [vmem:[#allocation2 + $0x98] sm:$0xff] %v1029
    %1062 = vst [vmem:[#allocation2 + $0xa0] sm:$0xff] %v1030
    %1063 = vst [vmem:[#allocation2 + $0xa8] sm:$0xff] %v1031
    %1064 = vst [vmem:[#allocation2 + $0xb0] sm:$0xff] %v1032
    %1065 = vst [vmem:[#allocation2 + $0xb8] sm:$0xff] %v1033
    %1066 = vst [vmem:[#allocation2 + $0xc0] sm:$0xff] %v1034
    %1067 = vst [vmem:[#allocation2 + $0xc8] sm:$0xff] %v1035
    %1068 = vst [vmem:[#allocation2 + $0xd0] sm:$0xff] %v1036
    %1069 = vst [vmem:[#allocation2 + $0xd8] sm:$0xff] %v1037
    %1070 = vst [vmem:[#allocation2 + $0xe0] sm:$0xff] %v1038
    %1071 = vst [vmem:[#allocation2 + $0xe8] sm:$0xff] %v1039
    %1072 = vst [vmem:[#allocation2 + $0xf0] sm:$0xff] %v1040
    %1073 = vst [vmem:[#allocation2 + $0xf8] sm:$0xff] %v1041
    // Predicated region
    $region38: #{tpu_custom_call.1} parent=1 // pred_check
      _
    $region39: #{tpu_custom_call.1} parent=1 // pred_check_branch
      %1075 = sbr.rel (0) target = $region41
    $region40: #{tpu_custom_call.1} parent=1 // pred_region
      %1077 = vsyncadd [#allocation3], 0
      %s1078 = sshll.u32 [#allocation2], 4
      %s1079 = int_to_ptr.vmem [resolvable:$true] %s1078
      %s1080 = sshll.u32 %s9, 4
      %s1081 = int_to_ptr.hbm [resolvable:$true] %s1080
      %1086 = dma.vmem_to_hbm [thread:$0]  %s1079, 4096, %s1081, [#allocation3], 128, 128, 8
    $region41: #{tpu_custom_call.1} parent=1 // pred_fallthru
      _
    // Predicated region
    $region42: #{tpu_custom_call.1} parent=1 // pred_check
      _
    $region43: #{tpu_custom_call.1} parent=1 // pred_check_branch
      %1088 = sbr.rel (0) target = $region45
    $region44: #{tpu_custom_call.1} parent=1 // pred_region
      %1090 = dma.done [#allocation3], 4096
    $region45: #{tpu_custom_call.1} parent=1 // pred_fallthru
      _
    %1091 = vsyncpa [#allocation3], 1

</llo_original>
